<compile_context>
chip_gen: v6e
topology: v6e:2x2x1
jax: 0.10.0
libtpu: 0.0.40
codegen_flags: <defaults>
</compile_context>

<pallas_src>
import jax
import jax.numpy as jnp
from jax.experimental import pallas as pl
from jax.experimental.pallas import tpu as pltpu

IN_FEATURES = 9
# Default rows per tile: ~4 MiB of (padded) input per block, a few us of DMA
# per grid step on every generation -> step overhead is amortized away.
DEFAULT_TILE_N = 8192


def snc_kernel(w_ref, b_ref, x_ref, o_ref):
    # w_ref: VMEM (9, 1)   b_ref: SMEM (1,)
    # x_ref: VMEM (TN, 9)  o_ref: VMEM (TN, 1)
    # Single MXU matmul does the 9-wide reduction; accumulate in f32.
    y = jnp.dot(x_ref[...], w_ref[...], preferred_element_type=jnp.float32)
    o_ref[...] = (y + b_ref[0]).astype(o_ref.dtype)


def snc_forward(I, W, b, *, tile_n=DEFAULT_TILE_N):
    """I: (N, 9).  W: nn.Linear weight with 9 elements ((1, 9) PyTorch layout,
    (9,), or (9, 1)).  b: bias with 1 element.  Returns (N, 1) = I @ W.T + b."""
    N, F = I.shape
    assert F == IN_FEATURES
    # (1, 9) row-major -> (9, 1) column keeps the PyTorch weight order.
    w_col = jnp.asarray(W, jnp.float32).reshape(IN_FEATURES, 1)
    b_flat = jnp.asarray(b, jnp.float32).reshape(-1)[:1]

    # Rows per tile: multiple of 8 (sublane), never larger than the padded
    # batch.  For N > tile_n the grid automatically has >= 2 parallel steps
    # (megacore sharding on v7x); for tiny N we use one exact-sized block.
    tn = int(min(tile_n, 8 * pl.cdiv(N, 8)))
    tn = max(8, 8 * (tn // 8))
    grid = (pl.cdiv(N, tn),)

    out = pl.pallas_call(
        snc_kernel,
        out_shape=jax.ShapeDtypeStruct((N, 1), I.dtype),
        grid=grid,
        in_specs=[
            # W column: tiny VMEM block, same block every step.
            pl.BlockSpec((IN_FEATURES, 1), lambda i: (0, 0)),
            # bias: scalar in SMEM.
            pl.BlockSpec(memory_space=pltpu.MemorySpace.SMEM),
            # batch rows in their natural (N, 9) layout.
            pl.BlockSpec((tn, IN_FEATURES), lambda i: (i, 0)),
        ],
        out_specs=pl.BlockSpec((tn, 1), lambda i: (i, 0)),
        compiler_params=pltpu.CompilerParams(
            dimension_semantics=("parallel",),
            # ~16 MiB double-buffered footprint at tn=8192; 32 MiB is safe on
            # v5e/v6e (128 MiB physical) and v7x (64 MiB physical).
            vmem_limit_bytes=32 * 1024 * 1024,
        ),
        cost_estimate=pl.CostEstimate(
            flops=2 * IN_FEATURES * N,
            transcendentals=0,
            bytes_accessed=N * (IN_FEATURES + 1) * 4 + (IN_FEATURES + 1) * 4,
        ),
    )(w_col, b_flat, I)
    return out


def init_params(key):
    # Match nn.Linear(9, 1) default init: U(-1/sqrt(in), 1/sqrt(in)).
    kw, kb = jax.random.split(key)
    bound = 1.0 / jnp.sqrt(float(IN_FEATURES))
    W = jax.random.uniform(kw, (1, IN_FEATURES), jnp.float32, -bound, bound)
    b = jax.random.uniform(kb, (1,), jnp.float32, -bound, bound)
    return W, b


if __name__ == "__main__":
    key = jax.random.PRNGKey(0)
    k_in, k_params = jax.random.split(key)

    # Small batch of 8 samples, 9 features each (e.g. flattened 3x3 patches).
    N = 8
    I = jax.random.normal(k_in, (N, IN_FEATURES), jnp.float32)
    W, b = init_params(k_params)

    out = snc_forward(I, W, b)
    jax.block_until_ready(out)

    # Reference check in plain JAX (PyTorch semantics: I @ W.T + b).
    ref = I @ W.T + b
    assert out.shape == (N, 1)
    assert jnp.allclose(out, ref, atol=1e-5, rtol=1e-5)

    # Small non-tile-aligned batch exercising a multi-step grid + ragged tail.
    N2 = 300
    I2 = jax.random.normal(jax.random.PRNGKey(1), (N2, IN_FEATURES), jnp.float32)
    out2 = snc_forward(I2, W, b, tile_n=128)
    jax.block_until_ready(out2)
    ref2 = I2 @ W.T + b
    assert out2.shape == (N2, 1)
    assert jnp.allclose(out2, ref2, atol=1e-5, rtol=1e-5)

    print("KERNEL_OK")
</pallas_src>

<mosaic_0001>
module attributes {stable_mosaic.version = 11 : i64} {
  func.func @snc_kernel(%arg0: i32, %arg1: memref<9x1xf32, #tpu.memory_space<vmem>>, %arg2: memref<1xf32, #tpu.memory_space<smem>>, %arg3: memref<8x9xf32, #tpu.memory_space<vmem>>, %arg4: memref<8x1xf32, #tpu.memory_space<vmem>>) attributes {dimension_semantics = [#tpu.dimension_semantics<parallel>], iteration_bounds = array<i64: 1>, scalar_prefetch = 0 : i64, scratch_operands = 0 : i64, tpu.core_type = #tpu.core_type<tc>, window_params = [{pipeline_mode = #tpu.pipeline_mode<synchronous>, transform_indices = @transform_0, window_bounds = array<i64: 9, 1>}, {transform_indices = @transform_1, window_bounds = array<i64: 1>}, {transform_indices = @transform_2, window_bounds = array<i64: 8, 9>}, {transform_indices = @transform_3, window_bounds = array<i64: 8, 1>}]} {
    %c0 = arith.constant 0 : index
    %c0_0 = arith.constant 0 : index
    %0 = vector.load %arg3[%c0, %c0_0] : memref<8x9xf32, #tpu.memory_space<vmem>>, vector<8x9xf32>
    %c0_1 = arith.constant 0 : index
    %c0_2 = arith.constant 0 : index
    %1 = vector.load %arg1[%c0_1, %c0_2] : memref<9x1xf32, #tpu.memory_space<vmem>>, vector<9x1xf32>
    %cst = arith.constant dense<0.000000e+00> : vector<8x1xf32>
    %2 = tpu.matmul %0, %1, %cst {dimension_numbers = #tpu.dot_dimension_numbers<[1], [0], [0], [1], [0, 0, 1, 1], [], []>} : vector<8x9xf32>, vector<9x1xf32>, vector<8x1xf32> -> vector<8x1xf32>
    %c0_3 = arith.constant 0 : index
    %3 = memref.load %arg2[%c0_3] : memref<1xf32, #tpu.memory_space<smem>>
    %4 = vector.broadcast %3 : f32 to vector<8x1xf32>
    %5 = arith.addf %2, %4 : vector<8x1xf32>
    %c0_4 = arith.constant 0 : index
    %c0_5 = arith.constant 0 : index
    %6 = vector.load %arg4[%c0_4, %c0_5] : memref<8x1xf32, #tpu.memory_space<vmem>>, vector<8x1xf32>
    tpu.vector_store %arg4[%c0_4, %c0_5], %5 {strides = array<i32>} : memref<8x1xf32, #tpu.memory_space<vmem>>, vector<8x1xf32>,
    return
  }
  func.func @transform_0(%arg0: i32) -> (i32, i32) {
    %c0_i32 = arith.constant 0 : i32
    %c0_i32_0 = arith.constant 0 : i32
    %c0_i32_1 = arith.constant 0 : i32
    return %c0_i32, %c0_i32_0 : i32, i32
  }
  func.func @transform_1(%arg0: i32) -> i32 {
    %c0_i32 = arith.constant 0 : i32
    %c0_i32_0 = arith.constant 0 : i32
    return %c0_i32 : i32
  }
  func.func @transform_2(%arg0: i32) -> (i32, i32) {
    %c0_i32 = arith.constant 0 : i32
    %c0_i32_0 = arith.constant 0 : i32
    return %arg0, %c0_i32 : i32, i32
  }
  func.func @transform_3(%arg0: i32) -> (i32, i32) {
    %c0_i32 = arith.constant 0 : i32
    %c0_i32_0 = arith.constant 0 : i32
    return %arg0, %c0_i32 : i32, i32
  }
}

</mosaic_0001>

<llo_original>
// kernel: tpu_custom_call.1
$region0: #{tpu_custom_call.1}
  #allocation0 [shape = 'u32[]', space=smem, size = 0x4, offset = 0x4, fixed_abs, tag = 'smem constant byte address 0x4 - core index']
  #allocation1 [shape = 'u32[144,128]{1,0:T(1,128)}', space=vmem, size = 0x12000, scoped, tag = 'internal scratch']
  #allocation2 [shape = 'f32[1]{0:T(128)S(6)}', space=smem, size = 0x200, scoped, tag = 'scoped memory for tpu_custom_call.1']
  %s0 = inlined_call_operand.vmem [shape: f32[9,1], index: 0, kind: input, shape index: {}]
  %s1 = inlined_call_operand.<no memory space> [shape: f32[1], index: 1, kind: input, shape index: {}]
  %s2 = inlined_call_operand.vmem [shape: f32[8,9], index: 2, kind: input, shape index: {}]
  %s3 = inlined_call_operand.vmem [shape: f32[8,1], index: 3, kind: output, shape index: {}]
  %s4 = sld [smem:[#allocation0]]
  $region22: #{tpu_custom_call.1} parent=0
    _
  %s6 = ssub.s32 1, %s4
  %s7 = scalar_select 0, %s6, %s4
  %8 = sst [smem:[#allocation2]] %s1
  // Predicated region
  $region2: #{tpu_custom_call.1} parent=0 // pred_check
    _
  $region3: #{tpu_custom_call.1} parent=0 // pred_check_branch
    %10 = sbr.rel (0) target = $region5
  $region4: #{tpu_custom_call.1} parent=0 // pred_region
    _
  $region5: #{tpu_custom_call.1} parent=0 // pred_fallthru
    _
  // Predicated region
  $region6: #{tpu_custom_call.1} parent=0 // pred_check
    _
  $region7: #{tpu_custom_call.1} parent=0 // pred_check_branch
    %12 = sbr.rel (0) target = $region9
  $region8: #{tpu_custom_call.1} parent=0 // pred_region
    _
  $region9: #{tpu_custom_call.1} parent=0 // pred_fallthru
    _
  // Predicated region
  $region10: #{tpu_custom_call.1} parent=0 // pred_check
    _
  $region11: #{tpu_custom_call.1} parent=0 // pred_check_branch
    %14 = sbr.rel (0) target = $region13
  $region12: #{tpu_custom_call.1} parent=0 // pred_region
    _
  $region13: #{tpu_custom_call.1} parent=0 // pred_fallthru
    _
  %v15 = vld [vmem:[%s2] sm:$0xff]
  %v16 = vld [vmem:[%s0] sm:$0xff]
  %v17 = vld [vmem:[%s0 + $0x8] sm:$0x1]
  %s18 = sld [smem:[#allocation2]]
  %v19 = vstv %s18
  %vm20 = vcmask 72704
  %v22 = vsel %vm20, %v15, 0
  %vm24 = vcmask 1040384
  %v26 = vsel %vm24, %v17, 0
  %28 = vmatprep.subr.mxu0 0.0
  %29 = vmatpush1.msra.mxu0 0.0
  %30 = vmatprep.subr.mxu0 0.0
  %31 = vmatpush1.msra.mxu0 0.0
  %32 = vmatprep.subr.mxu0 0.0
  %33 = vmatpush1.msra.mxu0 0.0
  %34 = vmatprep.subr.mxu0 0.0
  %35 = vmatpush1.msra.mxu0 0.0
  %36 = vmatprep.subr.mxu0 0.0
  %37 = vmatpush1.msra.mxu0 0.0
  %38 = vmatprep.subr.mxu0 0.0
  %39 = vmatpush1.msra.mxu0 0.0
  %40 = vmatprep.subr.mxu0 0.0
  %41 = vmatpush1.msra.mxu0 0.0
  %42 = vmatprep.subr.mxu0 0.0
  %43 = vmatpush1.msra.mxu0 0.0
  %44 = vmatprep.subr.mxu0 0.0
  %45 = vmatpush1.msra.mxu0 0.0
  %46 = vmatprep.subr.mxu0 0.0
  %47 = vmatpush1.msra.mxu0 0.0
  %48 = vmatprep.subr.mxu0 0.0
  %49 = vmatpush1.msra.mxu0 0.0
  %50 = vmatprep.subr.mxu0 0.0
  %51 = vmatpush1.msra.mxu0 0.0
  %52 = vmatprep.subr.mxu0 0.0
  %53 = vmatpush1.msra.mxu0 0.0
  %54 = vmatprep.subr.mxu0 0.0
  %55 = vmatpush1.msra.mxu0 0.0
  %56 = vmatprep.subr.mxu0 0.0
  %57 = vmatpush1.msra.mxu0 %v26
  %58 = vmatprep.subr.mxu0 0.0
  %59 = vmatpush1.msra.mxu0 %v16
  %60 = vmatprep.subr.mxu0 0.0
  %61 = vmatpush2.msra.mxu0 0.0
  %62 = vmatprep.subr.mxu0 0.0
  %63 = vmatpush2.msra.mxu0 0.0
  %64 = vmatprep.subr.mxu0 0.0
  %65 = vmatpush2.msra.mxu0 0.0
  %66 = vmatprep.subr.mxu0 0.0
  %67 = vmatpush2.msra.mxu0 0.0
  %68 = vmatprep.subr.mxu0 0.0
  %69 = vmatpush2.msra.mxu0 0.0
  %70 = vmatprep.subr.mxu0 0.0
  %71 = vmatpush2.msra.mxu0 0.0
  %72 = vmatprep.subr.mxu0 0.0
  %73 = vmatpush2.msra.mxu0 0.0
  %74 = vmatprep.subr.mxu0 0.0
  %75 = vmatpush2.msra.mxu0 0.0
  %76 = vmatprep.subr.mxu0 0.0
  %77 = vmatpush2.msra.mxu0 0.0
  %78 = vmatprep.subr.mxu0 0.0
  %79 = vmatpush2.msra.mxu0 0.0
  %80 = vmatprep.subr.mxu0 0.0
  %81 = vmatpush2.msra.mxu0 0.0
  %82 = vmatprep.subr.mxu0 0.0
  %83 = vmatpush2.msra.mxu0 0.0
  %84 = vmatprep.subr.mxu0 0.0
  %85 = vmatpush2.msra.mxu0 0.0
  %86 = vmatprep.subr.mxu0 0.0
  %87 = vmatpush2.msra.mxu0 0.0
  %88 = vmatprep.subr.mxu0 0.0
  %89 = vmatpush2.msra.mxu0 0.0
  %90 = vmatprep.subr.mxu0 0.0
  %91 = vmatpush2.msra.mxu0 0.0
  %92 = vmatprep.mubr.f32.mxu0 0.0
  %93 = vmatmul.mubr.f32.gmra.mxu0 %v22
  %v94 = vpop.f32.mrf.mxu0
  %v95 = vadd.f32 %v19, %v94
  %v96 = vpop.f32.mrf.mxu0
  %97 = vdwg.mxu0
  %vm98 = vcmask 7168
  %99 = vst.msk [vmem:[%s3] sm:$0xff] %vm98, %v95
  // Predicated region
  $region14: #{tpu_custom_call.1} parent=0 // pred_check
    _
  $region15: #{tpu_custom_call.1} parent=0 // pred_check_branch
    %101 = sbr.rel (0) target = $region17
  $region16: #{tpu_custom_call.1} parent=0 // pred_region
    _
  $region17: #{tpu_custom_call.1} parent=0 // pred_fallthru
    _
  // Predicated region
  $region18: #{tpu_custom_call.1} parent=0 // pred_check
    _
  $region19: #{tpu_custom_call.1} parent=0 // pred_check_branch
    %103 = sbr.rel (0) target = $region21
  $region20: #{tpu_custom_call.1} parent=0 // pred_region
    _
  $region21: #{tpu_custom_call.1} parent=0 // pred_fallthru
    _

</llo_original>
